<compile_context>
chip_gen: v6e
topology: v6e:2x2x1
jax: 0.10.0
libtpu: 0.0.40
codegen_flags: <defaults>
</compile_context>

<pallas_src>
import jax
import jax.numpy as jnp
from jax.experimental import pallas as pl
from jax.experimental.pallas import tpu as pltpu


def _linear_kernel(x_ref, wt_ref, b_ref, o_ref, acc_ref):
    # x_ref:   (TN, TK)        flattened-feature tile
    # wt_ref:  (TK, C_out)     transposed weight tile
    # b_ref:   (1,  C_out)     bias
    # o_ref:   (TN, C_out)     output tile (resident across the K axis)
    # acc_ref: (TN, C_out)     f32 accumulator scratch
    k = pl.program_id(1)

    @pl.when(k == 0)
    def _():
        acc_ref[...] = jnp.zeros_like(acc_ref)

    acc_ref[...] += jnp.dot(x_ref[...], wt_ref[...],
                            preferred_element_type=jnp.float32)

    @pl.when(k == pl.num_programs(1) - 1)
    def _():
        # Bias add only once, at the final reduction step.
        o_ref[...] = (acc_ref[...] + b_ref[...]).astype(o_ref.dtype)


def _pick_tk(K, max_tk=2048):
    """Largest 128-multiple tile that divides K (capped), else the full K."""
    if K % 128 != 0:
        return K  # full-extent block is always legal
    tk = min(max_tk, (K // 128) * 128)
    while K % tk != 0:
        tk -= 128
    return tk


def conv_forward(feature, w, b):
    """feature: (N, ...) any trailing shape; w: (outsize, linesize); b: (outsize,)."""
    N = feature.shape[0]
    x = feature.reshape(N, -1).astype(jnp.float32)          # (N, K)
    K = x.shape[1]
    C_out = w.shape[0]
    assert w.shape == (C_out, K)

    wt = jnp.asarray(w, jnp.float32).T                       # (K, C_out)
    b2 = jnp.asarray(b, jnp.float32).reshape(1, C_out)       # (1, C_out)

    tk = _pick_tk(K)
    nk = K // tk
    tn = N if N <= 128 else 128                               # batch tile
    nn = pl.cdiv(N, tn)

    cost = pl.CostEstimate(
        flops=2 * N * K * C_out,
        transcendentals=0,
        bytes_accessed=4 * (x.size + wt.size + b2.size + N * C_out),
    )

    out = pl.pallas_call(
        _linear_kernel,
        out_shape=jax.ShapeDtypeStruct((N, C_out), jnp.float32),
        grid_spec=pltpu.PrefetchScalarGridSpec(
            num_scalar_prefetch=0,
            grid=(nn, nk),
            in_specs=[
                pl.BlockSpec((tn, tk), lambda i, k: (i, k)),       # x tile
                pl.BlockSpec((tk, C_out), lambda i, k: (k, 0)),    # W.T tile
                pl.BlockSpec((1, C_out), lambda i, k: (0, 0)),     # bias
            ],
            out_specs=pl.BlockSpec((tn, C_out), lambda i, k: (i, 0)),
            scratch_shapes=[pltpu.VMEM((tn, C_out), jnp.float32)],
        ),
        compiler_params=pltpu.CompilerParams(
            dimension_semantics=("parallel", "arbitrary")),
        cost_estimate=cost,
    )(x, wt, b2)

    # Dropout(p=0.1): identity in eval/inference mode.
    # TODO(synk): training-mode dropout would use pltpu.prng_seed /
    #             pltpu.prng_random_bits inside the kernel.
    return out


def _reference(feature, w, b):
    x = feature.reshape(feature.shape[0], -1).astype(jnp.float32)
    return x @ jnp.asarray(w, jnp.float32).T + jnp.asarray(b, jnp.float32)[None, :]


if __name__ == "__main__":
    # Small shapes consistent with the module's forward:
    # feature (N, C, H, W) -> flattened linesize = C*H*W, Linear -> outsize.
    N, C, H, W = 2, 4, 16, 16
    linesize = C * H * W        # 1024
    outsize = 64

    key = jax.random.PRNGKey(0)
    kx, kw, kb = jax.random.split(key, 3)

    feature = jax.random.normal(kx, (N, C, H, W), dtype=jnp.float32)
    w = 0.05 * jax.random.normal(kw, (outsize, linesize), dtype=jnp.float32)
    b = 0.1 * jax.random.normal(kb, (outsize,), dtype=jnp.float32)

    out = conv_forward(feature, w, b)
    jax.block_until_ready(out)

    ref = _reference(feature, w, b)
    assert out.shape == (N, outsize)
    assert jnp.allclose(out, ref, atol=1e-3, rtol=1e-3)

    print("KERNEL_OK")
</pallas_src>

<mosaic_0001>
module attributes {stable_mosaic.version = 11 : i64} {
  func.func @_linear_kernel(%arg0: i32, %arg1: i32, %arg2: memref<2x1024xf32, #tpu.memory_space<vmem>>, %arg3: memref<1024x64xf32, #tpu.memory_space<vmem>>, %arg4: memref<1x64xf32, #tpu.memory_space<vmem>>, %arg5: memref<2x64xf32, #tpu.memory_space<vmem>>, %arg6: memref<2x64xf32, #tpu.memory_space<vmem>>) attributes {dimension_semantics = [#tpu.dimension_semantics<parallel>, #tpu.dimension_semantics<arbitrary>], iteration_bounds = array<i64: 1, 1>, scalar_prefetch = 0 : i64, scratch_operands = 1 : i64, tpu.core_type = #tpu.core_type<tc>, window_params = [{transform_indices = @transform_0, window_bounds = array<i64: 2, 1024>}, {transform_indices = @transform_1, window_bounds = array<i64: 1024, 64>}, {pipeline_mode = #tpu.pipeline_mode<synchronous>, transform_indices = @transform_2, window_bounds = array<i64: 1, 64>}, {transform_indices = @transform_3, window_bounds = array<i64: 2, 64>}]} {
    %c0_i32 = arith.constant 0 : i32
    %0 = arith.cmpi eq, %arg1, %c0_i32 : i32
    %1 = arith.extui %0 : i1 to i32
    %c0_i32_0 = arith.constant 0 : i32
    %2 = arith.cmpi ne, %1, %c0_i32_0 : i32
    scf.if %2 {
      %cst_10 = arith.constant 0.000000e+00 : f32
      %12 = vector.broadcast %cst_10 : f32 to vector<2x64xf32>
      %c0_11 = arith.constant 0 : index
      %c0_12 = arith.constant 0 : index
      %13 = vector.load %arg6[%c0_11, %c0_12] : memref<2x64xf32, #tpu.memory_space<vmem>>, vector<2x64xf32>
      tpu.vector_store %arg6[%c0_11, %c0_12], %12 {strides = array<i32>} : memref<2x64xf32, #tpu.memory_space<vmem>>, vector<2x64xf32>,
    } else {
    }
    %c0 = arith.constant 0 : index
    %c0_1 = arith.constant 0 : index
    %3 = vector.load %arg6[%c0, %c0_1] : memref<2x64xf32, #tpu.memory_space<vmem>>, vector<2x64xf32>
    %c0_2 = arith.constant 0 : index
    %c0_3 = arith.constant 0 : index
    %4 = vector.load %arg2[%c0_2, %c0_3] : memref<2x1024xf32, #tpu.memory_space<vmem>>, vector<2x1024xf32>
    %c0_4 = arith.constant 0 : index
    %c0_5 = arith.constant 0 : index
    %5 = vector.load %arg3[%c0_4, %c0_5] : memref<1024x64xf32, #tpu.memory_space<vmem>>, vector<1024x64xf32>
    %cst = arith.constant dense<0.000000e+00> : vector<2x64xf32>
    %6 = tpu.matmul %4, %5, %cst {dimension_numbers = #tpu.dot_dimension_numbers<[1], [0], [0], [1], [0, 0, 1, 1], [], []>} : vector<2x1024xf32>, vector<1024x64xf32>, vector<2x64xf32> -> vector<2x64xf32>
    %7 = arith.addf %3, %6 : vector<2x64xf32>
    %c0_6 = arith.constant 0 : index
    %c0_7 = arith.constant 0 : index
    %8 = vector.load %arg6[%c0_6, %c0_7] : memref<2x64xf32, #tpu.memory_space<vmem>>, vector<2x64xf32>
    tpu.vector_store %arg6[%c0_6, %c0_7], %7 {strides = array<i32>} : memref<2x64xf32, #tpu.memory_space<vmem>>, vector<2x64xf32>,
    %c0_i32_8 = arith.constant 0 : i32
    %9 = arith.cmpi eq, %arg1, %c0_i32_8 : i32
    %10 = arith.extui %9 : i1 to i32
    %c0_i32_9 = arith.constant 0 : i32
    %11 = arith.cmpi ne, %10, %c0_i32_9 : i32
    scf.if %11 {
      %c0_10 = arith.constant 0 : index
      %c0_11 = arith.constant 0 : index
      %12 = vector.load %arg6[%c0_10, %c0_11] : memref<2x64xf32, #tpu.memory_space<vmem>>, vector<2x64xf32>
      %c0_12 = arith.constant 0 : index
      %c0_13 = arith.constant 0 : index
      %13 = vector.load %arg4[%c0_12, %c0_13] : memref<1x64xf32, #tpu.memory_space<vmem>>, vector<1x64xf32>
      %14 = vector.broadcast %13 : vector<1x64xf32> to vector<2x64xf32>
      %15 = arith.addf %12, %14 : vector<2x64xf32>
      %c0_14 = arith.constant 0 : index
      %c0_15 = arith.constant 0 : index
      %16 = vector.load %arg5[%c0_14, %c0_15] : memref<2x64xf32, #tpu.memory_space<vmem>>, vector<2x64xf32>
      tpu.vector_store %arg5[%c0_14, %c0_15], %15 {strides = array<i32>} : memref<2x64xf32, #tpu.memory_space<vmem>>, vector<2x64xf32>,
    } else {
    }
    return
  }
  func.func @transform_0(%arg0: i32, %arg1: i32) -> (i32, i32) {
    %c0_i32 = arith.constant 0 : i32
    return %arg0, %arg1 : i32, i32
  }
  func.func @transform_1(%arg0: i32, %arg1: i32) -> (i32, i32) {
    %c0_i32 = arith.constant 0 : i32
    %c0_i32_0 = arith.constant 0 : i32
    return %arg1, %c0_i32 : i32, i32
  }
  func.func @transform_2(%arg0: i32, %arg1: i32) -> (i32, i32) {
    %c0_i32 = arith.constant 0 : i32
    %c0_i32_0 = arith.constant 0 : i32
    %c0_i32_1 = arith.constant 0 : i32
    return %c0_i32, %c0_i32_0 : i32, i32
  }
  func.func @transform_3(%arg0: i32, %arg1: i32) -> (i32, i32) {
    %c0_i32 = arith.constant 0 : i32
    %c0_i32_0 = arith.constant 0 : i32
    return %arg0, %c0_i32 : i32, i32
  }
}

</mosaic_0001>

<llo_original>
// kernel: tpu_custom_call.1
$region0: #{tpu_custom_call.1}
  #allocation0 [shape = 'u32[]', space=smem, size = 0x4, offset = 0x4, fixed_abs, tag = 'smem constant byte address 0x4 - core index']
  #allocation1 [shape = 'u32[144,128]{1,0:T(1,128)}', space=vmem, size = 0x12000, scoped, tag = 'internal scratch']
  #allocation2 [shape = 'f32[2,64]{1,0:T(2,128)}', space=vmem, size = 0x400, scoped, tag = 'scratch operand']
  %s0 = inlined_call_operand.vmem [shape: f32[2,1024], index: 0, kind: input, shape index: {}]
  %s1 = inlined_call_operand.vmem [shape: f32[1024,64], index: 1, kind: input, shape index: {}]
  %s2 = inlined_call_operand.vmem [shape: f32[1,64], index: 2, kind: input, shape index: {}]
  %s3 = inlined_call_operand.hbm [shape: f32[2,64], index: 3, kind: output, shape index: {}]
  %s4 = sld [smem:[#allocation0]]
  $region30: #{tpu_custom_call.1} parent=0
    _
  %s6 = ssub.s32 1, %s4
  %s7 = scalar_select 0, %s6, %s4
  $region1: #{tpu_custom_call.1} parent=0
    #allocation3 [shape = 'u8[1024]{0}', space=vmem, size = 0x400, scoped, tag = 'output window, operand 0, single buffered']
    #allocation4 [shape = 's32[1]{0}', space=sflag, size = 0x4, scoped, tag = 'scoped memory for tpu_custom_call.1']
    %8 = vsyncpa [#allocation4], 0
    // Predicated region
    $region2: #{tpu_custom_call.1} parent=1 // pred_check
      _
    $region3: #{tpu_custom_call.1} parent=1 // pred_check_branch
      %10 = sbr.rel (0) target = $region5
    $region4: #{tpu_custom_call.1} parent=1 // pred_region
      _
    $region5: #{tpu_custom_call.1} parent=1 // pred_fallthru
      _
    // Predicated region
    $region6: #{tpu_custom_call.1} parent=1 // pred_check
      _
    $region7: #{tpu_custom_call.1} parent=1 // pred_check_branch
      %12 = sbr.rel (0) target = $region9
    $region8: #{tpu_custom_call.1} parent=1 // pred_region
      _
    $region9: #{tpu_custom_call.1} parent=1 // pred_fallthru
      _
    // Predicated region
    $region10: #{tpu_custom_call.1} parent=1 // pred_check
      _
    $region11: #{tpu_custom_call.1} parent=1 // pred_check_branch
      %14 = sbr.rel (0) target = $region13
    $region12: #{tpu_custom_call.1} parent=1 // pred_region
      _
    $region13: #{tpu_custom_call.1} parent=1 // pred_fallthru
      _
    %p15 = scmp.eq.s32.totalorder 0, 0
    // Predicated region
    $region14: #{tpu_custom_call.1} parent=1 // pred_check
      %p16 = pneg %p15
    $region15: #{tpu_custom_call.1} parent=1 // pred_check_branch
      %18 = sbr.rel (%p16) target = $region17
    $region16: #{tpu_custom_call.1} parent=1 // pred_region
      %vm19 = vcmask 517120
      %20 = vst.msk [vmem:[#allocation2] sm:$0x3] %vm19, 0.0
    $region17: #{tpu_custom_call.1} parent=1 // pred_fallthru
      _
    %v21 = vld [vmem:[#allocation2] sm:$0x3]
    %v22 = vld [vmem:[%s0] sm:$0xff]
    %v23 = vld [vmem:[%s0 + $0x8] sm:$0xff]
    %v24 = vld [vmem:[%s1] sm:$0xff]
    %v25 = vld [vmem:[%s1 + $0x8] sm:$0xff]
    %v26 = vld [vmem:[%s1 + $0x10] sm:$0xff]
    %v27 = vld [vmem:[%s1 + $0x18] sm:$0xff]
    %v28 = vld [vmem:[%s1 + $0x20] sm:$0xff]
    %v29 = vld [vmem:[%s1 + $0x28] sm:$0xff]
    %v30 = vld [vmem:[%s1 + $0x30] sm:$0xff]
    %v31 = vld [vmem:[%s1 + $0x38] sm:$0xff]
    %v32 = vld [vmem:[%s1 + $0x40] sm:$0xff]
    %v33 = vld [vmem:[%s1 + $0x48] sm:$0xff]
    %v34 = vld [vmem:[%s1 + $0x50] sm:$0xff]
    %v35 = vld [vmem:[%s1 + $0x58] sm:$0xff]
    %v36 = vld [vmem:[%s1 + $0x60] sm:$0xff]
    %v37 = vld [vmem:[%s1 + $0x68] sm:$0xff]
    %v38 = vld [vmem:[%s1 + $0x70] sm:$0xff]
    %v39 = vld [vmem:[%s1 + $0x78] sm:$0xff]
    %v40 = vld [vmem:[%s1 + $0x80] sm:$0xff]
    %v41 = vld [vmem:[%s1 + $0x88] sm:$0xff]
    %v42 = vld [vmem:[%s1 + $0x90] sm:$0xff]
    %v43 = vld [vmem:[%s1 + $0x98] sm:$0xff]
    %v44 = vld [vmem:[%s1 + $0xa0] sm:$0xff]
    %v45 = vld [vmem:[%s1 + $0xa8] sm:$0xff]
    %v46 = vld [vmem:[%s1 + $0xb0] sm:$0xff]
    %v47 = vld [vmem:[%s1 + $0xb8] sm:$0xff]
    %v48 = vld [vmem:[%s1 + $0xc0] sm:$0xff]
    %v49 = vld [vmem:[%s1 + $0xc8] sm:$0xff]
    %v50 = vld [vmem:[%s1 + $0xd0] sm:$0xff]
    %v51 = vld [vmem:[%s1 + $0xd8] sm:$0xff]
    %v52 = vld [vmem:[%s1 + $0xe0] sm:$0xff]
    %v53 = vld [vmem:[%s1 + $0xe8] sm:$0xff]
    %v54 = vld [vmem:[%s1 + $0xf0] sm:$0xff]
    %v55 = vld [vmem:[%s1 + $0xf8] sm:$0xff]
    %v56 = vld [vmem:[%s1 + $0x100] sm:$0xff]
    %v57 = vld [vmem:[%s1 + $0x108] sm:$0xff]
    %v58 = vld [vmem:[%s1 + $0x110] sm:$0xff]
    %v59 = vld [vmem:[%s1 + $0x118] sm:$0xff]
    %v60 = vld [vmem:[%s1 + $0x120] sm:$0xff]
    %v61 = vld [vmem:[%s1 + $0x128] sm:$0xff]
    %v62 = vld [vmem:[%s1 + $0x130] sm:$0xff]
    %v63 = vld [vmem:[%s1 + $0x138] sm:$0xff]
    %v64 = vld [vmem:[%s1 + $0x140] sm:$0xff]
    %v65 = vld [vmem:[%s1 + $0x148] sm:$0xff]
    %v66 = vld [vmem:[%s1 + $0x150] sm:$0xff]
    %v67 = vld [vmem:[%s1 + $0x158] sm:$0xff]
    %v68 = vld [vmem:[%s1 + $0x160] sm:$0xff]
    %v69 = vld [vmem:[%s1 + $0x168] sm:$0xff]
    %v70 = vld [vmem:[%s1 + $0x170] sm:$0xff]
    %v71 = vld [vmem:[%s1 + $0x178] sm:$0xff]
    %v72 = vld [vmem:[%s1 + $0x180] sm:$0xff]
    %v73 = vld [vmem:[%s1 + $0x188] sm:$0xff]
    %v74 = vld [vmem:[%s1 + $0x190] sm:$0xff]
    %v75 = vld [vmem:[%s1 + $0x198] sm:$0xff]
    %v76 = vld [vmem:[%s1 + $0x1a0] sm:$0xff]
    %v77 = vld [vmem:[%s1 + $0x1a8] sm:$0xff]
    %v78 = vld [vmem:[%s1 + $0x1b0] sm:$0xff]
    %v79 = vld [vmem:[%s1 + $0x1b8] sm:$0xff]
    %v80 = vld [vmem:[%s1 + $0x1c0] sm:$0xff]
    %v81 = vld [vmem:[%s1 + $0x1c8] sm:$0xff]
    %v82 = vld [vmem:[%s1 + $0x1d0] sm:$0xff]
    %v83 = vld [vmem:[%s1 + $0x1d8] sm:$0xff]
    %v84 = vld [vmem:[%s1 + $0x1e0] sm:$0xff]
    %v85 = vld [vmem:[%s1 + $0x1e8] sm:$0xff]
    %v86 = vld [vmem:[%s1 + $0x1f0] sm:$0xff]
    %v87 = vld [vmem:[%s1 + $0x1f8] sm:$0xff]
    %v88 = vld [vmem:[%s1 + $0x200] sm:$0xff]
    %v89 = vld [vmem:[%s1 + $0x208] sm:$0xff]
    %v90 = vld [vmem:[%s1 + $0x210] sm:$0xff]
    %v91 = vld [vmem:[%s1 + $0x218] sm:$0xff]
    %v92 = vld [vmem:[%s1 + $0x220] sm:$0xff]
    %v93 = vld [vmem:[%s1 + $0x228] sm:$0xff]
    %v94 = vld [vmem:[%s1 + $0x230] sm:$0xff]
    %v95 = vld [vmem:[%s1 + $0x238] sm:$0xff]
    %v96 = vld [vmem:[%s1 + $0x240] sm:$0xff]
    %v97 = vld [vmem:[%s1 + $0x248] sm:$0xff]
    %v98 = vld [vmem:[%s1 + $0x250] sm:$0xff]
    %v99 = vld [vmem:[%s1 + $0x258] sm:$0xff]
    %v100 = vld [vmem:[%s1 + $0x260] sm:$0xff]
    %v101 = vld [vmem:[%s1 + $0x268] sm:$0xff]
    %v102 = vld [vmem:[%s1 + $0x270] sm:$0xff]
    %v103 = vld [vmem:[%s1 + $0x278] sm:$0xff]
    %v104 = vld [vmem:[%s1 + $0x280] sm:$0xff]
    %v105 = vld [vmem:[%s1 + $0x288] sm:$0xff]
    %v106 = vld [vmem:[%s1 + $0x290] sm:$0xff]
    %v107 = vld [vmem:[%s1 + $0x298] sm:$0xff]
    %v108 = vld [vmem:[%s1 + $0x2a0] sm:$0xff]
    %v109 = vld [vmem:[%s1 + $0x2a8] sm:$0xff]
    %v110 = vld [vmem:[%s1 + $0x2b0] sm:$0xff]
    %v111 = vld [vmem:[%s1 + $0x2b8] sm:$0xff]
    %v112 = vld [vmem:[%s1 + $0x2c0] sm:$0xff]
    %v113 = vld [vmem:[%s1 + $0x2c8] sm:$0xff]
    %v114 = vld [vmem:[%s1 + $0x2d0] sm:$0xff]
    %v115 = vld [vmem:[%s1 + $0x2d8] sm:$0xff]
    %v116 = vld [vmem:[%s1 + $0x2e0] sm:$0xff]
    %v117 = vld [vmem:[%s1 + $0x2e8] sm:$0xff]
    %v118 = vld [vmem:[%s1 + $0x2f0] sm:$0xff]
    %v119 = vld [vmem:[%s1 + $0x2f8] sm:$0xff]
    %v120 = vld [vmem:[%s1 + $0x300] sm:$0xff]
    %v121 = vld [vmem:[%s1 + $0x308] sm:$0xff]
    %v122 = vld [vmem:[%s1 + $0x310] sm:$0xff]
    %v123 = vld [vmem:[%s1 + $0x318] sm:$0xff]
    %v124 = vld [vmem:[%s1 + $0x320] sm:$0xff]
    %v125 = vld [vmem:[%s1 + $0x328] sm:$0xff]
    %v126 = vld [vmem:[%s1 + $0x330] sm:$0xff]
    %v127 = vld [vmem:[%s1 + $0x338] sm:$0xff]
    %v128 = vld [vmem:[%s1 + $0x340] sm:$0xff]
    %v129 = vld [vmem:[%s1 + $0x348] sm:$0xff]
    %v130 = vld [vmem:[%s1 + $0x350] sm:$0xff]
    %v131 = vld [vmem:[%s1 + $0x358] sm:$0xff]
    %v132 = vld [vmem:[%s1 + $0x360] sm:$0xff]
    %v133 = vld [vmem:[%s1 + $0x368] sm:$0xff]
    %v134 = vld [vmem:[%s1 + $0x370] sm:$0xff]
    %v135 = vld [vmem:[%s1 + $0x378] sm:$0xff]
    %v136 = vld [vmem:[%s1 + $0x380] sm:$0xff]
    %v137 = vld [vmem:[%s1 + $0x388] sm:$0xff]
    %v138 = vld [vmem:[%s1 + $0x390] sm:$0xff]
    %v139 = vld [vmem:[%s1 + $0x398] sm:$0xff]
    %v140 = vld [vmem:[%s1 + $0x3a0] sm:$0xff]
    %v141 = vld [vmem:[%s1 + $0x3a8] sm:$0xff]
    %v142 = vld [vmem:[%s1 + $0x3b0] sm:$0xff]
    %v143 = vld [vmem:[%s1 + $0x3b8] sm:$0xff]
    %v144 = vld [vmem:[%s1 + $0x3c0] sm:$0xff]
    %v145 = vld [vmem:[%s1 + $0x3c8] sm:$0xff]
    %v146 = vld [vmem:[%s1 + $0x3d0] sm:$0xff]
    %v147 = vld [vmem:[%s1 + $0x3d8] sm:$0xff]
    %v148 = vld [vmem:[%s1 + $0x3e0] sm:$0xff]
    %v149 = vld [vmem:[%s1 + $0x3e8] sm:$0xff]
    %v150 = vld [vmem:[%s1 + $0x3f0] sm:$0xff]
    %v151 = vld [vmem:[%s1 + $0x3f8] sm:$0xff]
    %v154 = vcombine.high %v22, %v22
    %v156 = vunpack.c.l.s4 1983009808
    %v157 = vunpack.c.0.s8 %v156
    %v158 = vlaneseq
    %v159 = vshrl.u32 %v158, 7
    %v160 = vsub.s32 %v157, %v159
    %v161 = vrot.slane %v22, %v160
    %v163 = vunpack.c.l.s4 1983009808
    %v164 = vunpack.c.0.s8 %v163
    %v165 = vlaneseq
    %v166 = vshrl.u32 %v165, 7
    %v167 = vsub.s32 %v164, %v166
    %v168 = vrot.slane %v154, %v167
    %v169 = vcombine.high %v161, %v161
    %v170 = vcombine.high %v168, %v168
    %v171 = vcombine.high %v23, %v23
    %v173 = vunpack.c.l.s4 1983009808
    %v174 = vunpack.c.0.s8 %v173
    %v175 = vlaneseq
    %v176 = vshrl.u32 %v175, 7
    %v177 = vsub.s32 %v174, %v176
    %v178 = vrot.slane %v23, %v177
    %v180 = vunpack.c.l.s4 1983009808
    %v181 = vunpack.c.0.s8 %v180
    %v182 = vlaneseq
    %v183 = vshrl.u32 %v182, 7
    %v184 = vsub.s32 %v181, %v183
    %v185 = vrot.slane %v171, %v184
    %v186 = vcombine.high %v178, %v178
    %v187 = vcombine.high %v185, %v185
    %196 = vmatprep.subr.mxu0 0.0
    %197 = vmatpush1.msra.mxu0 %v39
    %198 = vmatprep.subr.mxu0 0.0
    %199 = vmatpush1.msra.mxu0 %v38
    %200 = vmatprep.subr.mxu0 0.0
    %201 = vmatpush1.msra.mxu0 %v37
    %202 = vmatprep.subr.mxu0 0.0
    %203 = vmatpush1.msra.mxu0 %v36
    %204 = vmatprep.subr.mxu0 0.0
    %205 = vmatpush1.msra.mxu0 %v35
    %206 = vmatprep.subr.mxu0 0.0
    %207 = vmatpush1.msra.mxu0 %v34
    %208 = vmatprep.subr.mxu0 0.0
    %209 = vmatpush1.msra.mxu0 %v33
    %210 = vmatprep.subr.mxu0 0.0
    %211 = vmatpush1.msra.mxu0 %v32
    %212 = vmatprep.subr.mxu0 0.0
    %213 = vmatpush1.msra.mxu0 %v31
    %214 = vmatprep.subr.mxu0 0.0
    %215 = vmatpush1.msra.mxu0 %v30
    %216 = vmatprep.subr.mxu0 0.0
    %217 = vmatpush1.msra.mxu0 %v29
    %218 = vmatprep.subr.mxu0 0.0
    %219 = vmatpush1.msra.mxu0 %v28
    %220 = vmatprep.subr.mxu0 0.0
    %221 = vmatpush1.msra.mxu0 %v27
    %222 = vmatprep.subr.mxu0 0.0
    %223 = vmatpush1.msra.mxu0 %v26
    %224 = vmatprep.subr.mxu0 0.0
    %225 = vmatpush1.msra.mxu0 %v25
    %226 = vmatprep.subr.mxu0 0.0
    %227 = vmatpush1.msra.mxu0 %v24
    %228 = vmatprep.subr.mxu0 0.0
    %229 = vmatpush2.msra.mxu0 %v55
    %230 = vmatprep.subr.mxu0 0.0
    %231 = vmatpush2.msra.mxu0 %v54
    %232 = vmatprep.subr.mxu0 0.0
    %233 = vmatpush2.msra.mxu0 %v53
    %234 = vmatprep.subr.mxu0 0.0
    %235 = vmatpush2.msra.mxu0 %v52
    %236 = vmatprep.subr.mxu0 0.0
    %237 = vmatpush2.msra.mxu0 %v51
    %238 = vmatprep.subr.mxu0 0.0
    %239 = vmatpush2.msra.mxu0 %v50
    %240 = vmatprep.subr.mxu0 0.0
    %241 = vmatpush2.msra.mxu0 %v49
    %242 = vmatprep.subr.mxu0 0.0
    %243 = vmatpush2.msra.mxu0 %v48
    %244 = vmatprep.subr.mxu0 0.0
    %245 = vmatpush2.msra.mxu0 %v47
    %246 = vmatprep.subr.mxu0 0.0
    %247 = vmatpush2.msra.mxu0 %v46
    %248 = vmatprep.subr.mxu0 0.0
    %249 = vmatpush2.msra.mxu0 %v45
    %250 = vmatprep.subr.mxu0 0.0
    %251 = vmatpush2.msra.mxu0 %v44
    %252 = vmatprep.subr.mxu0 0.0
    %253 = vmatpush2.msra.mxu0 %v43
    %254 = vmatprep.subr.mxu0 0.0
    %255 = vmatpush2.msra.mxu0 %v42
    %256 = vmatprep.subr.mxu0 0.0
    %257 = vmatpush2.msra.mxu0 %v41
    %258 = vmatprep.subr.mxu0 0.0
    %259 = vmatpush2.msra.mxu0 %v40
    %260 = vmatprep.mubr.f32.mxu0 %v169
    %261 = vmatmul.mubr.f32.gmra.mxu0 %v161
    %v262 = vpop.f32.mrf.mxu0
    %v263 = vadd.f32 0.0, %v262
    %v264 = vpop.f32.mrf.mxu0
    %265 = vdwg.mxu0
    %266 = vmatprep.subr.mxu0 0.0
    %267 = vmatpush1.msra.mxu0 %v71
    %268 = vmatprep.subr.mxu0 0.0
    %269 = vmatpush1.msra.mxu0 %v70
    %270 = vmatprep.subr.mxu0 0.0
    %271 = vmatpush1.msra.mxu0 %v69
    %272 = vmatprep.subr.mxu0 0.0
    %273 = vmatpush1.msra.mxu0 %v68
    %274 = vmatprep.subr.mxu0 0.0
    %275 = vmatpush1.msra.mxu0 %v67
    %276 = vmatprep.subr.mxu0 0.0
    %277 = vmatpush1.msra.mxu0 %v66
    %278 = vmatprep.subr.mxu0 0.0
    %279 = vmatpush1.msra.mxu0 %v65
    %280 = vmatprep.subr.mxu0 0.0
    %281 = vmatpush1.msra.mxu0 %v64
    %282 = vmatprep.subr.mxu0 0.0
    %283 = vmatpush1.msra.mxu0 %v63
    %284 = vmatprep.subr.mxu0 0.0
    %285 = vmatpush1.msra.mxu0 %v62
    %286 = vmatprep.subr.mxu0 0.0
    %287 = vmatpush1.msra.mxu0 %v61
    %288 = vmatprep.subr.mxu0 0.0
    %289 = vmatpush1.msra.mxu0 %v60
    %290 = vmatprep.subr.mxu0 0.0
    %291 = vmatpush1.msra.mxu0 %v59
    %292 = vmatprep.subr.mxu0 0.0
    %293 = vmatpush1.msra.mxu0 %v58
    %294 = vmatprep.subr.mxu0 0.0
    %295 = vmatpush1.msra.mxu0 %v57
    %296 = vmatprep.subr.mxu0 0.0
    %297 = vmatpush1.msra.mxu0 %v56
    %298 = vmatprep.subr.mxu0 0.0
    %299 = vmatpush2.msra.mxu0 %v87
    %300 = vmatprep.subr.mxu0 0.0
    %301 = vmatpush2.msra.mxu0 %v86
    %302 = vmatprep.subr.mxu0 0.0
    %303 = vmatpush2.msra.mxu0 %v85
    %304 = vmatprep.subr.mxu0 0.0
    %305 = vmatpush2.msra.mxu0 %v84
    %306 = vmatprep.subr.mxu0 0.0
    %307 = vmatpush2.msra.mxu0 %v83
    %308 = vmatprep.subr.mxu0 0.0
    %309 = vmatpush2.msra.mxu0 %v82
    %310 = vmatprep.subr.mxu0 0.0
    %311 = vmatpush2.msra.mxu0 %v81
    %312 = vmatprep.subr.mxu0 0.0
    %313 = vmatpush2.msra.mxu0 %v80
    %314 = vmatprep.subr.mxu0 0.0
    %315 = vmatpush2.msra.mxu0 %v79
    %316 = vmatprep.subr.mxu0 0.0
    %317 = vmatpush2.msra.mxu0 %v78
    %318 = vmatprep.subr.mxu0 0.0
    %319 = vmatpush2.msra.mxu0 %v77
    %320 = vmatprep.subr.mxu0 0.0
    %321 = vmatpush2.msra.mxu0 %v76
    %322 = vmatprep.subr.mxu0 0.0
    %323 = vmatpush2.msra.mxu0 %v75
    %324 = vmatprep.subr.mxu0 0.0
    %325 = vmatpush2.msra.mxu0 %v74
    %326 = vmatprep.subr.mxu0 0.0
    %327 = vmatpush2.msra.mxu0 %v73
    %328 = vmatprep.subr.mxu0 0.0
    %329 = vmatpush2.msra.mxu0 %v72
    %330 = vmatprep.mubr.f32.mxu0 %v170
    %331 = vmatmul.mubr.f32.gmra.mxu0 %v168
    %v332 = vpop.f32.mrf.mxu0
    %v333 = vadd.f32 %v263, %v332
    %v334 = vpop.f32.mrf.mxu0
    %335 = vdwg.mxu0
    %336 = vmatprep.subr.mxu0 0.0
    %337 = vmatpush1.msra.mxu0 %v103
    %338 = vmatprep.subr.mxu0 0.0
    %339 = vmatpush1.msra.mxu0 %v102
    %340 = vmatprep.subr.mxu0 0.0
    %341 = vmatpush1.msra.mxu0 %v101
    %342 = vmatprep.subr.mxu0 0.0
    %343 = vmatpush1.msra.mxu0 %v100
    %344 = vmatprep.subr.mxu0 0.0
    %345 = vmatpush1.msra.mxu0 %v99
    %346 = vmatprep.subr.mxu0 0.0
    %347 = vmatpush1.msra.mxu0 %v98
    %348 = vmatprep.subr.mxu0 0.0
    %349 = vmatpush1.msra.mxu0 %v97
    %350 = vmatprep.subr.mxu0 0.0
    %351 = vmatpush1.msra.mxu0 %v96
    %352 = vmatprep.subr.mxu0 0.0
    %353 = vmatpush1.msra.mxu0 %v95
    %354 = vmatprep.subr.mxu0 0.0
    %355 = vmatpush1.msra.mxu0 %v94
    %356 = vmatprep.subr.mxu0 0.0
    %357 = vmatpush1.msra.mxu0 %v93
    %358 = vmatprep.subr.mxu0 0.0
    %359 = vmatpush1.msra.mxu0 %v92
    %360 = vmatprep.subr.mxu0 0.0
    %361 = vmatpush1.msra.mxu0 %v91
    %362 = vmatprep.subr.mxu0 0.0
    %363 = vmatpush1.msra.mxu0 %v90
    %364 = vmatprep.subr.mxu0 0.0
    %365 = vmatpush1.msra.mxu0 %v89
    %366 = vmatprep.subr.mxu0 0.0
    %367 = vmatpush1.msra.mxu0 %v88
    %368 = vmatprep.subr.mxu0 0.0
    %369 = vmatpush2.msra.mxu0 %v119
    %370 = vmatprep.subr.mxu0 0.0
    %371 = vmatpush2.msra.mxu0 %v118
    %372 = vmatprep.subr.mxu0 0.0
    %373 = vmatpush2.msra.mxu0 %v117
    %374 = vmatprep.subr.mxu0 0.0
    %375 = vmatpush2.msra.mxu0 %v116
    %376 = vmatprep.subr.mxu0 0.0
    %377 = vmatpush2.msra.mxu0 %v115
    %378 = vmatprep.subr.mxu0 0.0
    %379 = vmatpush2.msra.mxu0 %v114
    %380 = vmatprep.subr.mxu0 0.0
    %381 = vmatpush2.msra.mxu0 %v113
    %382 = vmatprep.subr.mxu0 0.0
    %383 = vmatpush2.msra.mxu0 %v112
    %384 = vmatprep.subr.mxu0 0.0
    %385 = vmatpush2.msra.mxu0 %v111
    %386 = vmatprep.subr.mxu0 0.0
    %387 = vmatpush2.msra.mxu0 %v110
    %388 = vmatprep.subr.mxu0 0.0
    %389 = vmatpush2.msra.mxu0 %v109
    %390 = vmatprep.subr.mxu0 0.0
    %391 = vmatpush2.msra.mxu0 %v108
    %392 = vmatprep.subr.mxu0 0.0
    %393 = vmatpush2.msra.mxu0 %v107
    %394 = vmatprep.subr.mxu0 0.0
    %395 = vmatpush2.msra.mxu0 %v106
    %396 = vmatprep.subr.mxu0 0.0
    %397 = vmatpush2.msra.mxu0 %v105
    %398 = vmatprep.subr.mxu0 0.0
    %399 = vmatpush2.msra.mxu0 %v104
    %400 = vmatprep.mubr.f32.mxu0 %v186
    %401 = vmatmul.mubr.f32.gmra.mxu0 %v178
    %v402 = vpop.f32.mrf.mxu0
    %v403 = vadd.f32 %v333, %v402
    %v404 = vpop.f32.mrf.mxu0
    %405 = vdwg.mxu0
    %406 = vmatprep.subr.mxu0 0.0
    %407 = vmatpush1.msra.mxu0 %v135
    %408 = vmatprep.subr.mxu0 0.0
    %409 = vmatpush1.msra.mxu0 %v134
    %410 = vmatprep.subr.mxu0 0.0
    %411 = vmatpush1.msra.mxu0 %v133
    %412 = vmatprep.subr.mxu0 0.0
    %413 = vmatpush1.msra.mxu0 %v132
    %414 = vmatprep.subr.mxu0 0.0
    %415 = vmatpush1.msra.mxu0 %v131
    %416 = vmatprep.subr.mxu0 0.0
    %417 = vmatpush1.msra.mxu0 %v130
    %418 = vmatprep.subr.mxu0 0.0
    %419 = vmatpush1.msra.mxu0 %v129
    %420 = vmatprep.subr.mxu0 0.0
    %421 = vmatpush1.msra.mxu0 %v128
    %422 = vmatprep.subr.mxu0 0.0
    %423 = vmatpush1.msra.mxu0 %v127
    %424 = vmatprep.subr.mxu0 0.0
    %425 = vmatpush1.msra.mxu0 %v126
    %426 = vmatprep.subr.mxu0 0.0
    %427 = vmatpush1.msra.mxu0 %v125
    %428 = vmatprep.subr.mxu0 0.0
    %429 = vmatpush1.msra.mxu0 %v124
    %430 = vmatprep.subr.mxu0 0.0
    %431 = vmatpush1.msra.mxu0 %v123
    %432 = vmatprep.subr.mxu0 0.0
    %433 = vmatpush1.msra.mxu0 %v122
    %434 = vmatprep.subr.mxu0 0.0
    %435 = vmatpush1.msra.mxu0 %v121
    %436 = vmatprep.subr.mxu0 0.0
    %437 = vmatpush1.msra.mxu0 %v120
    %438 = vmatprep.subr.mxu0 0.0
    %439 = vmatpush2.msra.mxu0 %v151
    %440 = vmatprep.subr.mxu0 0.0
    %441 = vmatpush2.msra.mxu0 %v150
    %442 = vmatprep.subr.mxu0 0.0
    %443 = vmatpush2.msra.mxu0 %v149
    %444 = vmatprep.subr.mxu0 0.0
    %445 = vmatpush2.msra.mxu0 %v148
    %446 = vmatprep.subr.mxu0 0.0
    %447 = vmatpush2.msra.mxu0 %v147
    %448 = vmatprep.subr.mxu0 0.0
    %449 = vmatpush2.msra.mxu0 %v146
    %450 = vmatprep.subr.mxu0 0.0
    %451 = vmatpush2.msra.mxu0 %v145
    %452 = vmatprep.subr.mxu0 0.0
    %453 = vmatpush2.msra.mxu0 %v144
    %454 = vmatprep.subr.mxu0 0.0
    %455 = vmatpush2.msra.mxu0 %v143
    %456 = vmatprep.subr.mxu0 0.0
    %457 = vmatpush2.msra.mxu0 %v142
    %458 = vmatprep.subr.mxu0 0.0
    %459 = vmatpush2.msra.mxu0 %v141
    %460 = vmatprep.subr.mxu0 0.0
    %461 = vmatpush2.msra.mxu0 %v140
    %462 = vmatprep.subr.mxu0 0.0
    %463 = vmatpush2.msra.mxu0 %v139
    %464 = vmatprep.subr.mxu0 0.0
    %465 = vmatpush2.msra.mxu0 %v138
    %466 = vmatprep.subr.mxu0 0.0
    %467 = vmatpush2.msra.mxu0 %v137
    %468 = vmatprep.subr.mxu0 0.0
    %469 = vmatpush2.msra.mxu0 %v136
    %470 = vmatprep.mubr.f32.mxu0 %v187
    %471 = vmatmul.mubr.f32.gmra.mxu0 %v185
    %v472 = vpop.f32.mrf.mxu0
    %v473 = vadd.f32 %v403, %v472
    %v474 = vpop.f32.mrf.mxu0
    %475 = vdwg.mxu0
    %v476 = vadd.f32 %v21, %v473
    %vm477 = vcmask 517120
    %478 = vst.msk [vmem:[#allocation2] sm:$0x3] %vm477, %v476
    // Predicated region
    $region18: #{tpu_custom_call.1} parent=1 // pred_check
      %p479 = pneg %p15
    $region19: #{tpu_custom_call.1} parent=1 // pred_check_branch
      %481 = sbr.rel (%p479) target = $region21
    $region20: #{tpu_custom_call.1} parent=1 // pred_region
      %v482 = vld [vmem:[#allocation2] sm:$0x3]
      %v483 = vld [vmem:[%s2] sm:$0x1]
      %v485 = vlaneseq
      %v486 = vshrl.u32 %v485, 7
      %v487 = vsub.s32 0, %v486
      %v488 = vrot.slane %v483, %v487
      %v490 = vadd.f32 %v482, %v488
      %491 = vst.msk [vmem:[#allocation3] sm:$0x3] %vm477, %v490
    $region21: #{tpu_custom_call.1} parent=1 // pred_fallthru
      _
    // Predicated region
    $region22: #{tpu_custom_call.1} parent=1 // pred_check
      _
    $region23: #{tpu_custom_call.1} parent=1 // pred_check_branch
      %493 = sbr.rel (0) target = $region25
    $region24: #{tpu_custom_call.1} parent=1 // pred_region
      %s495 = ssub.s32 32, 32
      %496 = vsyncadd [#allocation4], %s495
      %s498 = sshll.u32 [#allocation3], 4
      %s499 = int_to_ptr.vmem [resolvable:$true] %s498
      %501 = dma.vmem_to_hbm [thread:$0]  %s499, 32, %s3, [#allocation4]
    $region25: #{tpu_custom_call.1} parent=1 // pred_fallthru
      _
    // Predicated region
    $region26: #{tpu_custom_call.1} parent=1 // pred_check
      _
    $region27: #{tpu_custom_call.1} parent=1 // pred_check_branch
      %503 = sbr.rel (0) target = $region29
    $region28: #{tpu_custom_call.1} parent=1 // pred_region
      %504 = dma.done [#allocation4], 32
    $region29: #{tpu_custom_call.1} parent=1 // pred_fallthru
      _
    %505 = vsyncpa [#allocation4], 1

</llo_original>
